<compile_context>
chip_gen: v5e
topology: v5e:2x2
jax: 0.10.0
libtpu: 0.0.40
codegen_flags: <defaults>
</compile_context>

<pallas_src>
import math

import jax
import jax.numpy as jnp
from jax import lax
from jax.experimental import pallas as pl
from jax.experimental.pallas import tpu as pltpu


def _round_up(x, m):
    return ((x + m - 1) // m) * m


# ---------------------------------------------------------------------------
# Glue: sinusoidal timestep embedding (matches the PyTorch reference exactly)
# ---------------------------------------------------------------------------
def timestep_embedding(timesteps, dim, max_period=10000):
    half = dim // 2
    freqs = jnp.exp(
        -math.log(max_period) * jnp.arange(0, half, dtype=jnp.float32) / half
    )
    args = timesteps[:, None].astype(jnp.float32) * freqs[None]
    embedding = jnp.concatenate([jnp.cos(args), jnp.sin(args)], axis=-1)
    if dim % 2:
        embedding = jnp.concatenate(
            [embedding, jnp.zeros_like(embedding[:, :1])], axis=-1
        )
    return embedding


def _apply_act(x, act):
    if act == "tanh":
        return jnp.tanh(x)
    elif act == "sigmoid":
        return jax.nn.sigmoid(x)
    elif act == "relu":
        return jnp.maximum(x, 0.0)
    return x


# ---------------------------------------------------------------------------
# Pallas kernel: fused MLP over one batch tile (weights stay VMEM-resident).
# Layer 0 = three partial matmuls on the pre-split [noise | temb | con] blocks.
# ---------------------------------------------------------------------------
def _make_dnn_kernel(offsets, widths, acts, n_hidden, act_name, use_bf16):
    def kernel(noise_ref, temb_ref, con_ref, bias_ref,
               w0n_ref, w0e_ref, w0c_ref, *rest):
        w_refs = rest[:n_hidden]
        out_ref = rest[n_hidden]

        # ----- layer 0: three partial matmuls, f32 accumulation --------------
        y = jnp.dot(noise_ref[...], w0n_ref[...],
                    preferred_element_type=jnp.float32)
        y = y + jnp.dot(temb_ref[...], w0e_ref[...],
                        preferred_element_type=jnp.float32)
        y = y + jnp.dot(con_ref[...], w0c_ref[...],
                        preferred_element_type=jnp.float32)
        h = y + bias_ref[:, offsets[0]:offsets[0] + widths[0]]       # f32 bias
        if acts[0]:
            h = _apply_act(h, act_name)                              # f32 act

        # ----- remaining layers ----------------------------------------------
        for li in range(n_hidden):
            lhs = h.astype(jnp.bfloat16) if use_bf16 else h
            y = jnp.dot(lhs, w_refs[li][...],
                        preferred_element_type=jnp.float32)
            o = offsets[li + 1]
            h = y + bias_ref[:, o:o + widths[li + 1]]
            if acts[li + 1]:
                h = _apply_act(h, act_name)

        out_ref[...] = h.astype(out_ref.dtype)

    return kernel


# ---------------------------------------------------------------------------
# One-time parameter preparation: split + fold first layer, transpose, pad
# hidden widths to 128 lanes (last layer kept at its real width), pack biases.
# ---------------------------------------------------------------------------
def prepare_params(params, *, in_dims, out_dims, emb_size, use_bf16=True):
    assert len(in_dims) >= 2 and len(out_dims) >= 2
    assert out_dims[0] == in_dims[-1], "In and out dimensions must equal each other."
    d0 = in_dims[0]
    n_in = len(in_dims) - 1
    n_out = len(out_dims) - 1
    hp = lax.Precision.HIGHEST  # keep the weight-weight fold exact in f32
    w_dtype = jnp.bfloat16 if use_bf16 else jnp.float32

    # --- split first in-layer into [noise | temb | con] blocks, fold emb_layer
    w0T = params["in_w"][0].T.astype(jnp.float32)            # [2*d0+emb, out0]
    wfn = w0T[:d0]                                           # noise rows
    wfe = w0T[d0:d0 + emb_size]                              # time-emb rows
    wfc = w0T[d0 + emb_size:]                                # con rows
    wE_T = params["emb_w"].T.astype(jnp.float32)             # [emb, emb]
    w0e = jnp.matmul(wE_T, wfe, precision=hp)                # folded [emb, out0]
    b0 = params["in_b"][0].astype(jnp.float32) + jnp.matmul(
        params["emb_b"].astype(jnp.float32), wfe, precision=hp)

    # --- remaining layers: (W^T, b, has_act) ---------------------------------
    rest = []
    for li in range(1, n_in):
        rest.append((params["in_w"][li].T.astype(jnp.float32),
                     params["in_b"][li].astype(jnp.float32), True))
    for li in range(n_out):
        rest.append((params["out_w"][li].T.astype(jnp.float32),
                     params["out_b"][li].astype(jnp.float32),
                     li != n_out - 1))

    n_layers = 1 + len(rest)

    def out_pad(li, dout):
        # hidden widths padded to lane-dense multiples of 128; the LAST layer
        # keeps its real width so the kernel writes the real output directly.
        return dout if li == n_layers - 1 else _round_up(dout, 128)

    def padw(w, dinp, doutp):
        din, dout = w.shape
        z = jnp.zeros((dinp, doutp), jnp.float32).at[:din, :dout].set(w)
        return z.astype(w_dtype)

    out0 = int(w0T.shape[1])
    out0_p = out_pad(0, out0)
    first_ws = (padw(wfn, d0, out0_p),
                padw(w0e, emb_size, out0_p),
                padw(wfc, d0, out0_p))
    biases = [jnp.zeros((out0_p,), jnp.float32).at[:out0].set(b0)]
    acts = [True]

    hidden_ws = []
    prev_p = out0_p
    for idx, (w, b, a) in enumerate(rest):
        li = idx + 1
        din, dout = w.shape
        dout_p = out_pad(li, int(dout))
        hidden_ws.append(padw(w, prev_p, dout_p))
        biases.append(jnp.zeros((dout_p,), jnp.float32).at[:dout].set(b))
        acts.append(a)
        prev_p = dout_p

    widths = tuple(int(b.shape[0]) for b in biases)
    offsets = tuple(int(sum(widths[:i])) for i in range(len(widths)))
    bias_cat = jnp.concatenate(biases)[None, :]               # [1, sum(widths)]

    return {
        "first_ws": first_ws,
        "hidden_ws": tuple(hidden_ws),
        "bias_cat": bias_cat,
        "offsets": offsets,
        "widths": widths,
        "acts": tuple(acts),
        "d0": int(d0),
        "emb_size": int(emb_size),
        "d_out": int(out_dims[-1]),
        "use_bf16": bool(use_bf16),
    }


# ---------------------------------------------------------------------------
# Forward wrapper
# ---------------------------------------------------------------------------
def dnn_forward(noise_emb, con_emb, timesteps, prep, *, act="tanh",
                block_batch=512):
    batch = noise_emb.shape[0]
    d0 = prep["d0"]
    emb = prep["emb_size"]
    d_out = prep["d_out"]
    use_bf16 = prep["use_bf16"]

    # stream activations in bf16 on the fast path (cast once, here)
    in_dtype = jnp.bfloat16 if use_bf16 else jnp.float32
    temb = timestep_embedding(timesteps, emb).astype(in_dtype)
    noise = noise_emb.astype(in_dtype)
    con = con_emb.astype(in_dtype)

    first_ws = prep["first_ws"]
    hidden_ws = prep["hidden_ws"]
    bias_cat = prep["bias_cat"]
    n_hidden = len(hidden_ws)

    # batch tile: as large as possible (better HBM roofline), but capped so the
    # grid has >= 2 tiles when the batch allows -> both v7x TCs get work.
    tb = min(block_batch, _round_up(pl.cdiv(batch, 2), 16))
    tb = max(8, min(tb, _round_up(batch, 8)))
    grid = (pl.cdiv(batch, tb),)

    kernel = _make_dnn_kernel(prep["offsets"], prep["widths"], prep["acts"],
                              n_hidden, act, use_bf16)

    in_bytes_per_elem = 2 if use_bf16 else 4
    wbytes = sum(int(w.size) * w.dtype.itemsize for w in first_ws + hidden_ws)
    bbytes = int(bias_cat.size) * 4

    def resident_spec(shape, single_buffer):
        idx_map = lambda i: (0,) * len(shape)
        if single_buffer:
            return pl.BlockSpec(shape, idx_map, pipeline_mode=pl.Buffered(1))
        return pl.BlockSpec(shape, idx_map)

    def build(single_buffer_weights):
        in_specs = [
            pl.BlockSpec((tb, d0), lambda i: (i, 0)),    # noise (batch-tiled)
            pl.BlockSpec((tb, emb), lambda i: (i, 0)),   # temb
            pl.BlockSpec((tb, d0), lambda i: (i, 0)),    # con
            resident_spec(bias_cat.shape, single_buffer_weights),
        ]
        for w in first_ws + hidden_ws:                   # resident weights
            in_specs.append(resident_spec(w.shape, single_buffer_weights))
        out_specs = pl.BlockSpec((tb, d_out), lambda i: (i, 0))

        # VMEM budget: resident weights/bias (x1 or x2) + double-buffered
        # in/out batch tiles + inter-layer intermediates + headroom, capped by
        # the chip's physical VMEM (v7x: 64 MiB).
        resid_mult = 1 if single_buffer_weights else 2
        in_tile = tb * (2 * d0 + emb) * in_bytes_per_elem
        out_tile = tb * d_out * 4
        interm = 2 * tb * max(prep["widths"]) * 4
        budget = (resid_mult * (wbytes + bbytes)
                  + 2 * (in_tile + out_tile) + interm + (8 << 20))
        try:
            cap = int(pltpu.get_tpu_info().vmem_capacity_bytes)
        except Exception:
            cap = 64 << 20  # smallest across supported generations (v7x)
        vmem_limit = int(min(max(budget, 32 << 20), int(0.75 * cap)))

        flops = 2 * batch * sum(int(w.shape[0]) * int(w.shape[1])
                                for w in first_ws + hidden_ws)
        trans = batch * sum(w for w, a in zip(prep["widths"], prep["acts"]) if a)
        bytes_acc = (batch * (2 * d0 + emb) * in_bytes_per_elem
                     + batch * d_out * 4 + wbytes + bbytes)

        return pl.pallas_call(
            kernel,
            out_shape=jax.ShapeDtypeStruct((batch, d_out), jnp.float32),
            grid=grid,
            in_specs=in_specs,
            out_specs=out_specs,
            compiler_params=pltpu.CompilerParams(
                dimension_semantics=("parallel",),   # v7x: shard tiles on 2 TCs
                vmem_limit_bytes=vmem_limit,
            ),
            cost_estimate=pl.CostEstimate(
                flops=flops, transcendentals=trans, bytes_accessed=bytes_acc),
        )

    args = (noise, temb, con, bias_cat) + tuple(first_ws) + tuple(hidden_ws)
    try:
        return build(True)(*args)
    except Exception:
        # Fallback: default double-buffered resident weights if this Pallas
        # build rejects pipeline_mode=pl.Buffered(1).
        return build(False)(*args)


# ---------------------------------------------------------------------------
# Deterministic parameter init (mirrors DNN.init_weights, torch layout)
# ---------------------------------------------------------------------------
def init_params(key, in_dims, out_dims, emb_size):
    in_dims_temp = [in_dims[0] * 2 + emb_size] + list(in_dims[1:])
    out_dims_temp = list(out_dims)

    params = {"in_w": [], "in_b": [], "out_w": [], "out_b": []}

    def linear(key, d_in, d_out):
        kw, kb = jax.random.split(key)
        std = math.sqrt(2.0 / (d_in + d_out))
        w = std * jax.random.normal(kw, (d_out, d_in), dtype=jnp.float32)
        b = 0.001 * jax.random.normal(kb, (d_out,), dtype=jnp.float32)
        return w, b

    keys = jax.random.split(key, len(in_dims_temp) + len(out_dims_temp) + 1)
    ki = 0
    for d_in, d_out in zip(in_dims_temp[:-1], in_dims_temp[1:]):
        w, b = linear(keys[ki], d_in, d_out); ki += 1
        params["in_w"].append(w); params["in_b"].append(b)
    for d_in, d_out in zip(out_dims_temp[:-1], out_dims_temp[1:]):
        w, b = linear(keys[ki], d_in, d_out); ki += 1
        params["out_w"].append(w); params["out_b"].append(b)
    wE, bE = linear(keys[ki], emb_size, emb_size)
    params["emb_w"] = wE
    params["emb_b"] = bE
    return params


# ---------------------------------------------------------------------------
# Pure-JAX reference (mirrors the PyTorch forward, un-fused, un-padded)
# ---------------------------------------------------------------------------
def dnn_forward_ref(noise_emb, con_emb, timesteps, params, *, emb_size,
                    act="tanh"):
    temb = timestep_embedding(timesteps, emb_size)
    emb = temb @ params["emb_w"].T + params["emb_b"]
    h = jnp.concatenate([noise_emb, emb, con_emb], axis=-1)
    for w, b in zip(params["in_w"], params["in_b"]):
        h = _apply_act(h @ w.T + b, act)
    n_out = len(params["out_w"])
    for i, (w, b) in enumerate(zip(params["out_w"], params["out_b"])):
        h = h @ w.T + b
        if i != n_out - 1:
            h = _apply_act(h, act)
    return h


def _run_case(key, in_dims, out_dims, emb_size, act, batch,
              f32_tol, bf16_tol):
    k_noise, k_con, k_t, k_params = jax.random.split(key, 4)
    noise_emb = jax.random.normal(k_noise, (batch, in_dims[0]), dtype=jnp.float32)
    con_emb = jax.random.normal(k_con, (batch, in_dims[0]), dtype=jnp.float32)
    timesteps = jax.random.randint(k_t, (batch,), 0, 1000).astype(jnp.float32)

    params = init_params(k_params, in_dims, out_dims, emb_size)
    ref = dnn_forward_ref(noise_emb, con_emb, timesteps, params,
                          emb_size=emb_size, act=act)

    # f32-operand path: validates split/fold/padding/tiling.
    prep32 = prepare_params(params, in_dims=in_dims, out_dims=out_dims,
                            emb_size=emb_size, use_bf16=False)
    out32 = jax.block_until_ready(
        dnn_forward(noise_emb, con_emb, timesteps, prep32, act=act))
    assert out32.shape == (batch, out_dims[-1])
    assert jnp.allclose(out32, ref, atol=f32_tol, rtol=f32_tol), "f32 path mismatch"

    # bf16-stream / f32-accumulate fast path (MXU-native on all generations).
    prep16 = prepare_params(params, in_dims=in_dims, out_dims=out_dims,
                            emb_size=emb_size, use_bf16=True)
    out16 = jax.block_until_ready(
        dnn_forward(noise_emb, con_emb, timesteps, prep16, act=act))
    assert out16.shape == (batch, out_dims[-1])
    assert jnp.allclose(out16, ref, atol=bf16_tol, rtol=bf16_tol), "bf16 path mismatch"


if __name__ == "__main__":
    key = jax.random.PRNGKey(0)
    k1, k2 = jax.random.split(key)

    # Case 1: small config consistent with the module constraint
    # (out_dims[0] == in_dims[-1]); single grid tile.
    _run_case(k1, in_dims=[32, 16], out_dims=[16, 32], emb_size=8,
              act="tanh", batch=16, f32_tol=1e-3, bf16_tol=5e-2)

    # Case 2: deeper net, batch=128 -> two batch tiles (exercises the parallel
    # grid and multiple hidden layers with padded widths).
    _run_case(k2, in_dims=[64, 256, 64], out_dims=[64, 256, 64], emb_size=8,
              act="tanh", batch=128, f32_tol=1e-2, bf16_tol=5e-2)

    print("KERNEL_OK")
</pallas_src>

<mosaic_0001>
module attributes {stable_mosaic.version = 11 : i64} {
  func.func @kernel(%arg0: i32, %arg1: memref<16x32xf32, #tpu.memory_space<vmem>>, %arg2: memref<16x8xf32, #tpu.memory_space<vmem>>, %arg3: memref<16x32xf32, #tpu.memory_space<vmem>>, %arg4: memref<1x160xf32, #tpu.memory_space<vmem>>, %arg5: memref<32x128xf32, #tpu.memory_space<vmem>>, %arg6: memref<8x128xf32, #tpu.memory_space<vmem>>, %arg7: memref<32x128xf32, #tpu.memory_space<vmem>>, %arg8: memref<128x32xf32, #tpu.memory_space<vmem>>, %arg9: memref<16x32xf32, #tpu.memory_space<vmem>>) attributes {dimension_semantics = [#tpu.dimension_semantics<parallel>], iteration_bounds = array<i64: 1>, scalar_prefetch = 0 : i64, scratch_operands = 0 : i64, tpu.core_type = #tpu.core_type<tc>, window_params = [{transform_indices = @transform_0, window_bounds = array<i64: 16, 32>}, {transform_indices = @transform_1, window_bounds = array<i64: 16, 8>}, {transform_indices = @transform_2, window_bounds = array<i64: 16, 32>}, {pipeline_mode = #tpu.pipeline_mode<synchronous>, transform_indices = @transform_3, window_bounds = array<i64: 1, 160>}, {pipeline_mode = #tpu.pipeline_mode<synchronous>, transform_indices = @transform_4, window_bounds = array<i64: 32, 128>}, {pipeline_mode = #tpu.pipeline_mode<synchronous>, transform_indices = @transform_5, window_bounds = array<i64: 8, 128>}, {pipeline_mode = #tpu.pipeline_mode<synchronous>, transform_indices = @transform_6, window_bounds = array<i64: 32, 128>}, {pipeline_mode = #tpu.pipeline_mode<synchronous>, transform_indices = @transform_7, window_bounds = array<i64: 128, 32>}, {transform_indices = @transform_8, window_bounds = array<i64: 16, 32>}]} {
    %c0 = arith.constant 0 : index
    %c0_0 = arith.constant 0 : index
    %0 = vector.load %arg1[%c0, %c0_0] : memref<16x32xf32, #tpu.memory_space<vmem>>, vector<16x32xf32>
    %c0_1 = arith.constant 0 : index
    %c0_2 = arith.constant 0 : index
    %1 = vector.load %arg5[%c0_1, %c0_2] : memref<32x128xf32, #tpu.memory_space<vmem>>, vector<32x128xf32>
    %cst = arith.constant dense<0.000000e+00> : vector<16x128xf32>
    %2 = tpu.matmul %0, %1, %cst {dimension_numbers = #tpu.dot_dimension_numbers<[1], [0], [0], [1], [0, 0, 1, 1], [], []>} : vector<16x32xf32>, vector<32x128xf32>, vector<16x128xf32> -> vector<16x128xf32>
    %c0_3 = arith.constant 0 : index
    %c0_4 = arith.constant 0 : index
    %3 = vector.load %arg2[%c0_3, %c0_4] : memref<16x8xf32, #tpu.memory_space<vmem>>, vector<16x8xf32>
    %c0_5 = arith.constant 0 : index
    %c0_6 = arith.constant 0 : index
    %4 = vector.load %arg6[%c0_5, %c0_6] : memref<8x128xf32, #tpu.memory_space<vmem>>, vector<8x128xf32>
    %cst_7 = arith.constant dense<0.000000e+00> : vector<16x128xf32>
    %5 = tpu.matmul %3, %4, %cst_7 {dimension_numbers = #tpu.dot_dimension_numbers<[1], [0], [0], [1], [0, 0, 1, 1], [], []>} : vector<16x8xf32>, vector<8x128xf32>, vector<16x128xf32> -> vector<16x128xf32>
    %6 = arith.addf %2, %5 : vector<16x128xf32>
    %c0_8 = arith.constant 0 : index
    %c0_9 = arith.constant 0 : index
    %7 = vector.load %arg3[%c0_8, %c0_9] : memref<16x32xf32, #tpu.memory_space<vmem>>, vector<16x32xf32>
    %c0_10 = arith.constant 0 : index
    %c0_11 = arith.constant 0 : index
    %8 = vector.load %arg7[%c0_10, %c0_11] : memref<32x128xf32, #tpu.memory_space<vmem>>, vector<32x128xf32>
    %cst_12 = arith.constant dense<0.000000e+00> : vector<16x128xf32>
    %9 = tpu.matmul %7, %8, %cst_12 {dimension_numbers = #tpu.dot_dimension_numbers<[1], [0], [0], [1], [0, 0, 1, 1], [], []>} : vector<16x32xf32>, vector<32x128xf32>, vector<16x128xf32> -> vector<16x128xf32>
    %10 = arith.addf %6, %9 : vector<16x128xf32>
    %c0_13 = arith.constant 0 : index
    %c0_14 = arith.constant 0 : index
    %11 = vector.load %arg4[%c0_13, %c0_14] : memref<1x160xf32, #tpu.memory_space<vmem>>, vector<1x128xf32>
    %12 = vector.broadcast %11 : vector<1x128xf32> to vector<16x128xf32>
    %13 = arith.addf %10, %12 : vector<16x128xf32>
    %14 = math.tanh %13 : vector<16x128xf32>
    %c0_15 = arith.constant 0 : index
    %c0_16 = arith.constant 0 : index
    %15 = vector.load %arg8[%c0_15, %c0_16] : memref<128x32xf32, #tpu.memory_space<vmem>>, vector<128x32xf32>
    %cst_17 = arith.constant dense<0.000000e+00> : vector<16x32xf32>
    %16 = tpu.matmul %14, %15, %cst_17 {dimension_numbers = #tpu.dot_dimension_numbers<[1], [0], [0], [1], [0, 0, 1, 1], [], []>} : vector<16x128xf32>, vector<128x32xf32>, vector<16x32xf32> -> vector<16x32xf32>
    %c0_18 = arith.constant 0 : index
    %c128 = arith.constant 128 : index
    %17 = vector.load %arg4[%c0_18, %c128] : memref<1x160xf32, #tpu.memory_space<vmem>>, vector<1x32xf32>
    %18 = vector.broadcast %17 : vector<1x32xf32> to vector<16x32xf32>
    %19 = arith.addf %16, %18 : vector<16x32xf32>
    %c0_19 = arith.constant 0 : index
    %c0_20 = arith.constant 0 : index
    %20 = vector.load %arg9[%c0_19, %c0_20] : memref<16x32xf32, #tpu.memory_space<vmem>>, vector<16x32xf32>
    tpu.vector_store %arg9[%c0_19, %c0_20], %19 {strides = array<i32>} : memref<16x32xf32, #tpu.memory_space<vmem>>, vector<16x32xf32>,
    return
  }
  func.func @transform_0(%arg0: i32) -> (i32, i32) {
    %c0_i32 = arith.constant 0 : i32
    %c0_i32_0 = arith.constant 0 : i32
    return %arg0, %c0_i32 : i32, i32
  }
  func.func @transform_1(%arg0: i32) -> (i32, i32) {
    %c0_i32 = arith.constant 0 : i32
    %c0_i32_0 = arith.constant 0 : i32
    return %arg0, %c0_i32 : i32, i32
  }
  func.func @transform_2(%arg0: i32) -> (i32, i32) {
    %c0_i32 = arith.constant 0 : i32
    %c0_i32_0 = arith.constant 0 : i32
    return %arg0, %c0_i32 : i32, i32
  }
  func.func @transform_3(%arg0: i32) -> (i32, i32) {
    %c0_i32 = arith.constant 0 : i32
    %c0_i32_0 = arith.constant 0 : i32
    %c0_i32_1 = arith.constant 0 : i32
    return %c0_i32, %c0_i32_0 : i32, i32
  }
  func.func @transform_4(%arg0: i32) -> (i32, i32) {
    %c0_i32 = arith.constant 0 : i32
    %c0_i32_0 = arith.constant 0 : i32
    %c0_i32_1 = arith.constant 0 : i32
    return %c0_i32, %c0_i32_0 : i32, i32
  }
  func.func @transform_5(%arg0: i32) -> (i32, i32) {
    %c0_i32 = arith.constant 0 : i32
    %c0_i32_0 = arith.constant 0 : i32
    %c0_i32_1 = arith.constant 0 : i32
    return %c0_i32, %c0_i32_0 : i32, i32
  }
  func.func @transform_6(%arg0: i32) -> (i32, i32) {
    %c0_i32 = arith.constant 0 : i32
    %c0_i32_0 = arith.constant 0 : i32
    %c0_i32_1 = arith.constant 0 : i32
    return %c0_i32, %c0_i32_0 : i32, i32
  }
  func.func @transform_7(%arg0: i32) -> (i32, i32) {
    %c0_i32 = arith.constant 0 : i32
    %c0_i32_0 = arith.constant 0 : i32
    %c0_i32_1 = arith.constant 0 : i32
    return %c0_i32, %c0_i32_0 : i32, i32
  }
  func.func @transform_8(%arg0: i32) -> (i32, i32) {
    %c0_i32 = arith.constant 0 : i32
    %c0_i32_0 = arith.constant 0 : i32
    return %arg0, %c0_i32 : i32, i32
  }
}

module attributes {stable_mosaic.version = 11 : i64} {
  func.func @kernel(%arg0: i32, %arg1: memref<16x32xf32, #tpu.memory_space<vmem>>, %arg2: memref<16x8xf32, #tpu.memory_space<vmem>>, %arg3: memref<16x32xf32, #tpu.memory_space<vmem>>, %arg4: memref<1x160xf32, #tpu.memory_space<vmem>>, %arg5: memref<32x128xf32, #tpu.memory_space<vmem>>, %arg6: memref<8x128xf32, #tpu.memory_space<vmem>>, %arg7: memref<32x128xf32, #tpu.memory_space<vmem>>, %arg8: memref<128x32xf32, #tpu.memory_space<vmem>>, %arg9: memref<16x32xf32, #tpu.memory_space<vmem>>) attributes {dimension_semantics = [#tpu.dimension_semantics<parallel>], iteration_bounds = array<i64: 1>, scalar_prefetch = 0 : i64, scratch_operands = 0 : i64, tpu.core_type = #tpu.core_type<tc>, window_params = [{transform_indices = @transform_0, window_bounds = array<i64: 16, 32>}, {transform_indices = @transform_1, window_bounds = array<i64: 16, 8>}, {transform_indices = @transform_2, window_bounds = array<i64: 16, 32>}, {pipeline_mode = #tpu.pipeline_mode<synchronous>, transform_indices = @transform_3, window_bounds = array<i64: 1, 160>}, {pipeline_mode = #tpu.pipeline_mode<synchronous>, transform_indices = @transform_4, window_bounds = array<i64: 32, 128>}, {pipeline_mode = #tpu.pipeline_mode<synchronous>, transform_indices = @transform_5, window_bounds = array<i64: 8, 128>}, {pipeline_mode = #tpu.pipeline_mode<synchronous>, transform_indices = @transform_6, window_bounds = array<i64: 32, 128>}, {pipeline_mode = #tpu.pipeline_mode<synchronous>, transform_indices = @transform_7, window_bounds = array<i64: 128, 32>}, {transform_indices = @transform_8, window_bounds = array<i64: 16, 32>}]} {
    %c0 = arith.constant 0 : index
    %c0_0 = arith.constant 0 : index
    %0 = vector.load %arg1[%c0, %c0_0] : memref<16x32xf32, #tpu.memory_space<vmem>>, vector<16x32xf32>
    %c0_1 = arith.constant 0 : index
    %c0_2 = arith.constant 0 : index
    %1 = vector.load %arg5[%c0_1, %c0_2] : memref<32x128xf32, #tpu.memory_space<vmem>>, vector<32x128xf32>
    %cst = arith.constant dense<0.000000e+00> : vector<16x128xf32>
    %2 = tpu.matmul %0, %1, %cst {dimension_numbers = #tpu.dot_dimension_numbers<[1], [0], [0], [1], [0, 0, 1, 1], [], []>} : vector<16x32xf32>, vector<32x128xf32>, vector<16x128xf32> -> vector<16x128xf32>
    %c0_3 = arith.constant 0 : index
    %c0_4 = arith.constant 0 : index
    %3 = vector.load %arg2[%c0_3, %c0_4] : memref<16x8xf32, #tpu.memory_space<vmem>>, vector<16x8xf32>
    %c0_5 = arith.constant 0 : index
    %c0_6 = arith.constant 0 : index
    %4 = vector.load %arg6[%c0_5, %c0_6] : memref<8x128xf32, #tpu.memory_space<vmem>>, vector<8x128xf32>
    %cst_7 = arith.constant dense<0.000000e+00> : vector<16x128xf32>
    %5 = tpu.matmul %3, %4, %cst_7 {dimension_numbers = #tpu.dot_dimension_numbers<[1], [0], [0], [1], [0, 0, 1, 1], [], []>} : vector<16x8xf32>, vector<8x128xf32>, vector<16x128xf32> -> vector<16x128xf32>
    %6 = arith.addf %2, %5 : vector<16x128xf32>
    %c0_8 = arith.constant 0 : index
    %c0_9 = arith.constant 0 : index
    %7 = vector.load %arg3[%c0_8, %c0_9] : memref<16x32xf32, #tpu.memory_space<vmem>>, vector<16x32xf32>
    %c0_10 = arith.constant 0 : index
    %c0_11 = arith.constant 0 : index
    %8 = vector.load %arg7[%c0_10, %c0_11] : memref<32x128xf32, #tpu.memory_space<vmem>>, vector<32x128xf32>
    %cst_12 = arith.constant dense<0.000000e+00> : vector<16x128xf32>
    %9 = tpu.matmul %7, %8, %cst_12 {dimension_numbers = #tpu.dot_dimension_numbers<[1], [0], [0], [1], [0, 0, 1, 1], [], []>} : vector<16x32xf32>, vector<32x128xf32>, vector<16x128xf32> -> vector<16x128xf32>
    %10 = arith.addf %6, %9 : vector<16x128xf32>
    %c0_13 = arith.constant 0 : index
    %c0_14 = arith.constant 0 : index
    %11 = vector.load %arg4[%c0_13, %c0_14] : memref<1x160xf32, #tpu.memory_space<vmem>>, vector<1x128xf32>
    %12 = vector.broadcast %11 : vector<1x128xf32> to vector<16x128xf32>
    %13 = arith.addf %10, %12 : vector<16x128xf32>
    %14 = math.tanh %13 : vector<16x128xf32>
    %c0_15 = arith.constant 0 : index
    %c0_16 = arith.constant 0 : index
    %15 = vector.load %arg8[%c0_15, %c0_16] : memref<128x32xf32, #tpu.memory_space<vmem>>, vector<128x32xf32>
    %cst_17 = arith.constant dense<0.000000e+00> : vector<16x32xf32>
    %16 = tpu.matmul %14, %15, %cst_17 {dimension_numbers = #tpu.dot_dimension_numbers<[1], [0], [0], [1], [0, 0, 1, 1], [], []>} : vector<16x128xf32>, vector<128x32xf32>, vector<16x32xf32> -> vector<16x32xf32>
    %c0_18 = arith.constant 0 : index
    %c128 = arith.constant 128 : index
    %17 = vector.load %arg4[%c0_18, %c128] : memref<1x160xf32, #tpu.memory_space<vmem>>, vector<1x32xf32>
    %18 = vector.broadcast %17 : vector<1x32xf32> to vector<16x32xf32>
    %19 = arith.addf %16, %18 : vector<16x32xf32>
    %c0_19 = arith.constant 0 : index
    %c0_20 = arith.constant 0 : index
    %20 = vector.load %arg9[%c0_19, %c0_20] : memref<16x32xf32, #tpu.memory_space<vmem>>, vector<16x32xf32>
    tpu.vector_store %arg9[%c0_19, %c0_20], %19 {strides = array<i32>} : memref<16x32xf32, #tpu.memory_space<vmem>>, vector<16x32xf32>,
    return
  }
  func.func @transform_0(%arg0: i32) -> (i32, i32) {
    %c0_i32 = arith.constant 0 : i32
    %c0_i32_0 = arith.constant 0 : i32
    return %arg0, %c0_i32 : i32, i32
  }
  func.func @transform_1(%arg0: i32) -> (i32, i32) {
    %c0_i32 = arith.constant 0 : i32
    %c0_i32_0 = arith.constant 0 : i32
    return %arg0, %c0_i32 : i32, i32
  }
  func.func @transform_2(%arg0: i32) -> (i32, i32) {
    %c0_i32 = arith.constant 0 : i32
    %c0_i32_0 = arith.constant 0 : i32
    return %arg0, %c0_i32 : i32, i32
  }
  func.func @transform_3(%arg0: i32) -> (i32, i32) {
    %c0_i32 = arith.constant 0 : i32
    %c0_i32_0 = arith.constant 0 : i32
    %c0_i32_1 = arith.constant 0 : i32
    return %c0_i32, %c0_i32_0 : i32, i32
  }
  func.func @transform_4(%arg0: i32) -> (i32, i32) {
    %c0_i32 = arith.constant 0 : i32
    %c0_i32_0 = arith.constant 0 : i32
    %c0_i32_1 = arith.constant 0 : i32
    return %c0_i32, %c0_i32_0 : i32, i32
  }
  func.func @transform_5(%arg0: i32) -> (i32, i32) {
    %c0_i32 = arith.constant 0 : i32
    %c0_i32_0 = arith.constant 0 : i32
    %c0_i32_1 = arith.constant 0 : i32
    return %c0_i32, %c0_i32_0 : i32, i32
  }
  func.func @transform_6(%arg0: i32) -> (i32, i32) {
    %c0_i32 = arith.constant 0 : i32
    %c0_i32_0 = arith.constant 0 : i32
    %c0_i32_1 = arith.constant 0 : i32
    return %c0_i32, %c0_i32_0 : i32, i32
  }
  func.func @transform_7(%arg0: i32) -> (i32, i32) {
    %c0_i32 = arith.constant 0 : i32
    %c0_i32_0 = arith.constant 0 : i32
    %c0_i32_1 = arith.constant 0 : i32
    return %c0_i32, %c0_i32_0 : i32, i32
  }
  func.func @transform_8(%arg0: i32) -> (i32, i32) {
    %c0_i32 = arith.constant 0 : i32
    %c0_i32_0 = arith.constant 0 : i32
    return %arg0, %c0_i32 : i32, i32
  }
}

</mosaic_0001>

<llo_original>
// kernel: tpu_custom_call.1
$region0: #{tpu_custom_call.1}
  #allocation0 [shape = 'u32[]', space=smem, size = 0x4, offset = 0x4, fixed_abs, tag = 'smem constant byte address 0x4 - core index']
  #allocation1 [shape = 'u32[72,128]{1,0:T(1,128)}', space=vmem, size = 0x9000, scoped, tag = 'internal scratch']
  %s0 = inlined_call_operand.vmem [shape: f32[16,32], index: 0, kind: input, shape index: {}]
  %s1 = inlined_call_operand.vmem [shape: f32[16,8], index: 1, kind: input, shape index: {}]
  %s2 = inlined_call_operand.vmem [shape: f32[16,32], index: 2, kind: input, shape index: {}]
  %s3 = inlined_call_operand.vmem [shape: f32[1,160], index: 3, kind: input, shape index: {}]
  %s4 = inlined_call_operand.vmem [shape: f32[32,128], index: 4, kind: input, shape index: {}]
  %s5 = inlined_call_operand.vmem [shape: f32[8,128], index: 5, kind: input, shape index: {}]
  %s6 = inlined_call_operand.vmem [shape: f32[32,128], index: 6, kind: input, shape index: {}]
  %s7 = inlined_call_operand.vmem [shape: f32[128,32], index: 7, kind: input, shape index: {}]
  %s8 = inlined_call_operand.hbm [shape: f32[16,32], index: 8, kind: output, shape index: {}]
  %s9 = sld [smem:[#allocation0]]
  $region42: #{tpu_custom_call.1} parent=0
    _
  %s11 = ssub.s32 1, %s9
  %s12 = scalar_select 0, %s11, %s9
  $region1: #{tpu_custom_call.1} parent=0
    #allocation2 [shape = 'u8[8192]{0}', space=vmem, size = 0x2000, scoped, tag = 'output window, operand 0, single buffered']
    #allocation3 [shape = 's32[1]{0}', space=sflag, size = 0x4, scoped, tag = 'scoped memory for tpu_custom_call.1']
    %13 = vsyncpa [#allocation3], 0
    // Predicated region
    $region2: #{tpu_custom_call.1} parent=1 // pred_check
      _
    $region3: #{tpu_custom_call.1} parent=1 // pred_check_branch
      %15 = sbr.rel (0) target = $region5
    $region4: #{tpu_custom_call.1} parent=1 // pred_region
      _
    $region5: #{tpu_custom_call.1} parent=1 // pred_fallthru
      _
    // Predicated region
    $region6: #{tpu_custom_call.1} parent=1 // pred_check
      _
    $region7: #{tpu_custom_call.1} parent=1 // pred_check_branch
      %17 = sbr.rel (0) target = $region9
    $region8: #{tpu_custom_call.1} parent=1 // pred_region
      _
    $region9: #{tpu_custom_call.1} parent=1 // pred_fallthru
      _
    // Predicated region
    $region10: #{tpu_custom_call.1} parent=1 // pred_check
      _
    $region11: #{tpu_custom_call.1} parent=1 // pred_check_branch
      %19 = sbr.rel (0) target = $region13
    $region12: #{tpu_custom_call.1} parent=1 // pred_region
      _
    $region13: #{tpu_custom_call.1} parent=1 // pred_fallthru
      _
    // Predicated region
    $region14: #{tpu_custom_call.1} parent=1 // pred_check
      _
    $region15: #{tpu_custom_call.1} parent=1 // pred_check_branch
      %21 = sbr.rel (0) target = $region17
    $region16: #{tpu_custom_call.1} parent=1 // pred_region
      _
    $region17: #{tpu_custom_call.1} parent=1 // pred_fallthru
      _
    // Predicated region
    $region18: #{tpu_custom_call.1} parent=1 // pred_check
      _
    $region19: #{tpu_custom_call.1} parent=1 // pred_check_branch
      %23 = sbr.rel (0) target = $region21
    $region20: #{tpu_custom_call.1} parent=1 // pred_region
      _
    $region21: #{tpu_custom_call.1} parent=1 // pred_fallthru
      _
    // Predicated region
    $region22: #{tpu_custom_call.1} parent=1 // pred_check
      _
    $region23: #{tpu_custom_call.1} parent=1 // pred_check_branch
      %25 = sbr.rel (0) target = $region25
    $region24: #{tpu_custom_call.1} parent=1 // pred_region
      _
    $region25: #{tpu_custom_call.1} parent=1 // pred_fallthru
      _
    // Predicated region
    $region26: #{tpu_custom_call.1} parent=1 // pred_check
      _
    $region27: #{tpu_custom_call.1} parent=1 // pred_check_branch
      %27 = sbr.rel (0) target = $region29
    $region28: #{tpu_custom_call.1} parent=1 // pred_region
      _
    $region29: #{tpu_custom_call.1} parent=1 // pred_fallthru
      _
    // Predicated region
    $region30: #{tpu_custom_call.1} parent=1 // pred_check
      _
    $region31: #{tpu_custom_call.1} parent=1 // pred_check_branch
      %29 = sbr.rel (0) target = $region33
    $region32: #{tpu_custom_call.1} parent=1 // pred_region
      _
    $region33: #{tpu_custom_call.1} parent=1 // pred_fallthru
      _
    %v30 = vld [vmem:[%s0] sm:$0xff]
    %v31 = vld [vmem:[%s0 + $0x8] sm:$0xff]
    %v32 = vld [vmem:[%s4] sm:$0xff]
    %v33 = vld [vmem:[%s4 + $0x8] sm:$0xff]
    %v34 = vld [vmem:[%s4 + $0x10] sm:$0xff]
    %v35 = vld [vmem:[%s4 + $0x18] sm:$0xff]
    %v36 = vld [vmem:[%s1] sm:$0xff]
    %v37 = vld [vmem:[%s1 + $0x8] sm:$0xff]
    %v38 = vld [vmem:[%s5] sm:$0xff]
    %vm39 = vcmask 64512
    %v41 = vsel %vm39, %v36, 0
    %v44 = vsel %vm39, %v37, 0
    %46 = vmatpush.msra.mxu0 0.0
    %47 = vmatpush.msra.mxu0 0.0
    %48 = vmatpush.msra.mxu0 0.0
    %49 = vmatpush.msra.mxu0 0.0
    %50 = vmatpush.msra.mxu0 0.0
    %51 = vmatpush.msra.mxu0 0.0
    %52 = vmatpush.msra.mxu0 0.0
    %53 = vmatpush.msra.mxu0 0.0
    %54 = vmatpush.msra.mxu0 0.0
    %55 = vmatpush.msra.mxu0 0.0
    %56 = vmatpush.msra.mxu0 0.0
    %57 = vmatpush.msra.mxu0 0.0
    %58 = vmatpush.msra.mxu0 0.0
    %59 = vmatpush.msra.mxu0 0.0
    %60 = vmatpush.msra.mxu0 0.0
    %61 = vmatpush.msra.mxu0 %v38
    %62 = vmatmul.f32.gmra.mxu0 %v41
    %v63 = vpop.f32.mrf.mxu0
    %v64 = vadd.f32 0.0, %v63
    %65 = vmatmul.f32.gmra.mxu0 %v44
    %v66 = vpop.f32.mrf.mxu0
    %v67 = vadd.f32 0.0, %v66
    %68 = vdwg.mxu0
    %vm69 = vcmask 261120
    %v71 = vsel %vm69, %v30, 0
    %v74 = vsel %vm69, %v31, 0
    %76 = vmatpush.msra.mxu0 0.0
    %77 = vmatpush.msra.mxu0 0.0
    %78 = vmatpush.msra.mxu0 0.0
    %79 = vmatpush.msra.mxu0 0.0
    %80 = vmatpush.msra.mxu0 0.0
    %81 = vmatpush.msra.mxu0 0.0
    %82 = vmatpush.msra.mxu0 0.0
    %83 = vmatpush.msra.mxu0 0.0
    %84 = vmatpush.msra.mxu0 0.0
    %85 = vmatpush.msra.mxu0 0.0
    %86 = vmatpush.msra.mxu0 0.0
    %87 = vmatpush.msra.mxu0 0.0
    %88 = vmatpush.msra.mxu0 %v35
    %89 = vmatpush.msra.mxu0 %v34
    %90 = vmatpush.msra.mxu0 %v33
    %91 = vmatpush.msra.mxu0 %v32
    %92 = vmatmul.f32.gmra.mxu0 %v71
    %v93 = vpop.f32.mrf.mxu0
    %v94 = vadd.f32 %v64, %v93
    %95 = vmatmul.f32.gmra.mxu0 %v74
    %v96 = vpop.f32.mrf.mxu0
    %v97 = vadd.f32 %v67, %v96
    %98 = vdwg.mxu0
    %v99 = vld [vmem:[%s2] sm:$0xff]
    %v100 = vld [vmem:[%s2 + $0x8] sm:$0xff]
    %v101 = vld [vmem:[%s6] sm:$0xff]
    %v102 = vld [vmem:[%s6 + $0x8] sm:$0xff]
    %v103 = vld [vmem:[%s6 + $0x10] sm:$0xff]
    %v104 = vld [vmem:[%s6 + $0x18] sm:$0xff]
    %v106 = vsel %vm69, %v99, 0
    %v109 = vsel %vm69, %v100, 0
    %111 = vmatpush.msra.mxu0 0.0
    %112 = vmatpush.msra.mxu0 0.0
    %113 = vmatpush.msra.mxu0 0.0
    %114 = vmatpush.msra.mxu0 0.0
    %115 = vmatpush.msra.mxu0 0.0
    %116 = vmatpush.msra.mxu0 0.0
    %117 = vmatpush.msra.mxu0 0.0
    %118 = vmatpush.msra.mxu0 0.0
    %119 = vmatpush.msra.mxu0 0.0
    %120 = vmatpush.msra.mxu0 0.0
    %121 = vmatpush.msra.mxu0 0.0
    %122 = vmatpush.msra.mxu0 0.0
    %123 = vmatpush.msra.mxu0 %v104
    %124 = vmatpush.msra.mxu0 %v103
    %125 = vmatpush.msra.mxu0 %v102
    %126 = vmatpush.msra.mxu0 %v101
    %127 = vmatmul.f32.gmra.mxu0 %v106
    %v128 = vpop.f32.mrf.mxu0
    %v129 = vadd.f32 0.0, %v128
    %130 = vmatmul.f32.gmra.mxu0 %v109
    %v131 = vpop.f32.mrf.mxu0
    %v132 = vadd.f32 0.0, %v131
    %133 = vdwg.mxu0
    %v134 = vadd.f32 %v94, %v129
    %v135 = vadd.f32 %v97, %v132
    %v136 = vld [vmem:[%s3] sm:$0x1]
    %v138 = vperm.slane %v136, 0
    %v140 = vadd.f32 %v134, %v138
    %v141 = vadd.f32 %v135, %v138
    %v142 = vtanh.pop %v140
    %v143 = vtanh.pop %v141
    %v144 = vld [vmem:[%s7] sm:$0xff]
    %v145 = vld [vmem:[%s7 + $0x8] sm:$0xff]
    %v146 = vld [vmem:[%s7 + $0x10] sm:$0xff]
    %v147 = vld [vmem:[%s7 + $0x18] sm:$0xff]
    %v148 = vld [vmem:[%s7 + $0x20] sm:$0xff]
    %v149 = vld [vmem:[%s7 + $0x28] sm:$0xff]
    %v150 = vld [vmem:[%s7 + $0x30] sm:$0xff]
    %v151 = vld [vmem:[%s7 + $0x38] sm:$0xff]
    %v152 = vld [vmem:[%s7 + $0x40] sm:$0xff]
    %v153 = vld [vmem:[%s7 + $0x48] sm:$0xff]
    %v154 = vld [vmem:[%s7 + $0x50] sm:$0xff]
    %v155 = vld [vmem:[%s7 + $0x58] sm:$0xff]
    %v156 = vld [vmem:[%s7 + $0x60] sm:$0xff]
    %v157 = vld [vmem:[%s7 + $0x68] sm:$0xff]
    %v158 = vld [vmem:[%s7 + $0x70] sm:$0xff]
    %v159 = vld [vmem:[%s7 + $0x78] sm:$0xff]
    %v160 = vld [vmem:[%s3 + $0x1] sm:$0x1]
    %v162 = vperm.slane %v160, 0
    %164 = vmatpush.msra.mxu0 %v159
    %165 = vmatpush.msra.mxu0 %v158
    %166 = vmatpush.msra.mxu0 %v157
    %167 = vmatpush.msra.mxu0 %v156
    %168 = vmatpush.msra.mxu0 %v155
    %169 = vmatpush.msra.mxu0 %v154
    %170 = vmatpush.msra.mxu0 %v153
    %171 = vmatpush.msra.mxu0 %v152
    %172 = vmatpush.msra.mxu0 %v151
    %173 = vmatpush.msra.mxu0 %v150
    %174 = vmatpush.msra.mxu0 %v149
    %175 = vmatpush.msra.mxu0 %v148
    %176 = vmatpush.msra.mxu0 %v147
    %177 = vmatpush.msra.mxu0 %v146
    %178 = vmatpush.msra.mxu0 %v145
    %179 = vmatpush.msra.mxu0 %v144
    %180 = vmatmul.f32.gmra.mxu0 %v142
    %v181 = vpop.f32.mrf.mxu0
    %v182 = vadd.f32 %v162, %v181
    %183 = vmatmul.f32.gmra.mxu0 %v143
    %v184 = vpop.f32.mrf.mxu0
    %v185 = vadd.f32 %v162, %v184
    %186 = vdwg.mxu0
    %187 = vst.msk [vmem:[#allocation2] sm:$0xff] %vm69, %v182
    %188 = vst.msk [vmem:[#allocation2 + $0x8] sm:$0xff] %vm69, %v185
    // Predicated region
    $region34: #{tpu_custom_call.1} parent=1 // pred_check
      _
    $region35: #{tpu_custom_call.1} parent=1 // pred_check_branch
      %190 = sbr.rel (0) target = $region37
    $region36: #{tpu_custom_call.1} parent=1 // pred_region
      %192 = vsyncadd [#allocation3], 0
      %s193 = sshll.u32 [#allocation2], 4
      %s194 = int_to_ptr.vmem [resolvable:$true] %s193
      %s195 = sshll.u32 %s8, 4
      %s196 = int_to_ptr.hbm [resolvable:$true] %s195
      %201 = dma.vmem_to_hbm [thread:$0]  %s194, 256, %s196, [#allocation3], 128, 128, 8
    $region37: #{tpu_custom_call.1} parent=1 // pred_fallthru
      _
    // Predicated region
    $region38: #{tpu_custom_call.1} parent=1 // pred_check
      _
    $region39: #{tpu_custom_call.1} parent=1 // pred_check_branch
      %203 = sbr.rel (0) target = $region41
    $region40: #{tpu_custom_call.1} parent=1 // pred_region
      %205 = dma.done [#allocation3], 256
    $region41: #{tpu_custom_call.1} parent=1 // pred_fallthru
      _
    %206 = vsyncpa [#allocation3], 1

// kernel: tpu_custom_call.1
$region0: #{tpu_custom_call.1}
  #allocation0 [shape = 'u32[]', space=smem, size = 0x4, offset = 0x4, fixed_abs, tag = 'smem constant byte address 0x4 - core index']
  #allocation1 [shape = 'u32[72,128]{1,0:T(1,128)}', space=vmem, size = 0x9000, scoped, tag = 'internal scratch']
  %s0 = inlined_call_operand.vmem [shape: f32[16,32], index: 0, kind: input, shape index: {}]
  %s1 = inlined_call_operand.vmem [shape: f32[16,8], index: 1, kind: input, shape index: {}]
  %s2 = inlined_call_operand.vmem [shape: f32[16,32], index: 2, kind: input, shape index: {}]
  %s3 = inlined_call_operand.vmem [shape: f32[1,160], index: 3, kind: input, shape index: {}]
  %s4 = inlined_call_operand.vmem [shape: f32[32,128], index: 4, kind: input, shape index: {}]
  %s5 = inlined_call_operand.vmem [shape: f32[8,128], index: 5, kind: input, shape index: {}]
  %s6 = inlined_call_operand.vmem [shape: f32[32,128], index: 6, kind: input, shape index: {}]
  %s7 = inlined_call_operand.vmem [shape: f32[128,32], index: 7, kind: input, shape index: {}]
  %s8 = inlined_call_operand.hbm [shape: f32[16,32], index: 8, kind: output, shape index: {}]
  %s9 = sld [smem:[#allocation0]]
  $region42: #{tpu_custom_call.1} parent=0
    _
  %s11 = ssub.s32 1, %s9
  %s12 = scalar_select 0, %s11, %s9
  $region1: #{tpu_custom_call.1} parent=0
    #allocation2 [shape = 'u8[8192]{0}', space=vmem, size = 0x2000, scoped, tag = 'output window, operand 0, single buffered']
    #allocation3 [shape = 's32[1]{0}', space=sflag, size = 0x4, scoped, tag = 'scoped memory for tpu_custom_call.1']
    %13 = vsyncpa [#allocation3], 0
    // Predicated region
    $region2: #{tpu_custom_call.1} parent=1 // pred_check
      _
    $region3: #{tpu_custom_call.1} parent=1 // pred_check_branch
      %15 = sbr.rel (0) target = $region5
    $region4: #{tpu_custom_call.1} parent=1 // pred_region
      _
    $region5: #{tpu_custom_call.1} parent=1 // pred_fallthru
      _
    // Predicated region
    $region6: #{tpu_custom_call.1} parent=1 // pred_check
      _
    $region7: #{tpu_custom_call.1} parent=1 // pred_check_branch
      %17 = sbr.rel (0) target = $region9
    $region8: #{tpu_custom_call.1} parent=1 // pred_region
      _
    $region9: #{tpu_custom_call.1} parent=1 // pred_fallthru
      _
    // Predicated region
    $region10: #{tpu_custom_call.1} parent=1 // pred_check
      _
    $region11: #{tpu_custom_call.1} parent=1 // pred_check_branch
      %19 = sbr.rel (0) target = $region13
    $region12: #{tpu_custom_call.1} parent=1 // pred_region
      _
    $region13: #{tpu_custom_call.1} parent=1 // pred_fallthru
      _
    // Predicated region
    $region14: #{tpu_custom_call.1} parent=1 // pred_check
      _
    $region15: #{tpu_custom_call.1} parent=1 // pred_check_branch
      %21 = sbr.rel (0) target = $region17
    $region16: #{tpu_custom_call.1} parent=1 // pred_region
      _
    $region17: #{tpu_custom_call.1} parent=1 // pred_fallthru
      _
    // Predicated region
    $region18: #{tpu_custom_call.1} parent=1 // pred_check
      _
    $region19: #{tpu_custom_call.1} parent=1 // pred_check_branch
      %23 = sbr.rel (0) target = $region21
    $region20: #{tpu_custom_call.1} parent=1 // pred_region
      _
    $region21: #{tpu_custom_call.1} parent=1 // pred_fallthru
      _
    // Predicated region
    $region22: #{tpu_custom_call.1} parent=1 // pred_check
      _
    $region23: #{tpu_custom_call.1} parent=1 // pred_check_branch
      %25 = sbr.rel (0) target = $region25
    $region24: #{tpu_custom_call.1} parent=1 // pred_region
      _
    $region25: #{tpu_custom_call.1} parent=1 // pred_fallthru
      _
    // Predicated region
    $region26: #{tpu_custom_call.1} parent=1 // pred_check
      _
    $region27: #{tpu_custom_call.1} parent=1 // pred_check_branch
      %27 = sbr.rel (0) target = $region29
    $region28: #{tpu_custom_call.1} parent=1 // pred_region
      _
    $region29: #{tpu_custom_call.1} parent=1 // pred_fallthru
      _
    // Predicated region
    $region30: #{tpu_custom_call.1} parent=1 // pred_check
      _
    $region31: #{tpu_custom_call.1} parent=1 // pred_check_branch
      %29 = sbr.rel (0) target = $region33
    $region32: #{tpu_custom_call.1} parent=1 // pred_region
      _
    $region33: #{tpu_custom_call.1} parent=1 // pred_fallthru
      _
    %v30 = vld [vmem:[%s0] sm:$0xff]
    %v31 = vld [vmem:[%s0 + $0x8] sm:$0xff]
    %v32 = vld [vmem:[%s4] sm:$0xff]
    %v33 = vld [vmem:[%s4 + $0x8] sm:$0xff]
    %v34 = vld [vmem:[%s4 + $0x10] sm:$0xff]
    %v35 = vld [vmem:[%s4 + $0x18] sm:$0xff]
    %v36 = vld [vmem:[%s1] sm:$0xff]
    %v37 = vld [vmem:[%s1 + $0x8] sm:$0xff]
    %v38 = vld [vmem:[%s5] sm:$0xff]
    %vm39 = vcmask 64512
    %v41 = vsel %vm39, %v36, 0
    %v44 = vsel %vm39, %v37, 0
    %46 = vmatpush.msra.mxu0 0.0
    %47 = vmatpush.msra.mxu0 0.0
    %48 = vmatpush.msra.mxu0 0.0
    %49 = vmatpush.msra.mxu0 0.0
    %50 = vmatpush.msra.mxu0 0.0
    %51 = vmatpush.msra.mxu0 0.0
    %52 = vmatpush.msra.mxu0 0.0
    %53 = vmatpush.msra.mxu0 0.0
    %54 = vmatpush.msra.mxu0 0.0
    %55 = vmatpush.msra.mxu0 0.0
    %56 = vmatpush.msra.mxu0 0.0
    %57 = vmatpush.msra.mxu0 0.0
    %58 = vmatpush.msra.mxu0 0.0
    %59 = vmatpush.msra.mxu0 0.0
    %60 = vmatpush.msra.mxu0 0.0
    %61 = vmatpush.msra.mxu0 %v38
    %62 = vmatmul.f32.gmra.mxu0 %v41
    %v63 = vpop.f32.mrf.mxu0
    %v64 = vadd.f32 0.0, %v63
    %65 = vmatmul.f32.gmra.mxu0 %v44
    %v66 = vpop.f32.mrf.mxu0
    %v67 = vadd.f32 0.0, %v66
    %68 = vdwg.mxu0
    %vm69 = vcmask 261120
    %v71 = vsel %vm69, %v30, 0
    %v74 = vsel %vm69, %v31, 0
    %76 = vmatpush.msra.mxu0 0.0
    %77 = vmatpush.msra.mxu0 0.0
    %78 = vmatpush.msra.mxu0 0.0
    %79 = vmatpush.msra.mxu0 0.0
    %80 = vmatpush.msra.mxu0 0.0
    %81 = vmatpush.msra.mxu0 0.0
    %82 = vmatpush.msra.mxu0 0.0
    %83 = vmatpush.msra.mxu0 0.0
    %84 = vmatpush.msra.mxu0 0.0
    %85 = vmatpush.msra.mxu0 0.0
    %86 = vmatpush.msra.mxu0 0.0
    %87 = vmatpush.msra.mxu0 0.0
    %88 = vmatpush.msra.mxu0 %v35
    %89 = vmatpush.msra.mxu0 %v34
    %90 = vmatpush.msra.mxu0 %v33
    %91 = vmatpush.msra.mxu0 %v32
    %92 = vmatmul.f32.gmra.mxu0 %v71
    %v93 = vpop.f32.mrf.mxu0
    %v94 = vadd.f32 %v64, %v93
    %95 = vmatmul.f32.gmra.mxu0 %v74
    %v96 = vpop.f32.mrf.mxu0
    %v97 = vadd.f32 %v67, %v96
    %98 = vdwg.mxu0
    %v99 = vld [vmem:[%s2] sm:$0xff]
    %v100 = vld [vmem:[%s2 + $0x8] sm:$0xff]
    %v101 = vld [vmem:[%s6] sm:$0xff]
    %v102 = vld [vmem:[%s6 + $0x8] sm:$0xff]
    %v103 = vld [vmem:[%s6 + $0x10] sm:$0xff]
    %v104 = vld [vmem:[%s6 + $0x18] sm:$0xff]
    %v106 = vsel %vm69, %v99, 0
    %v109 = vsel %vm69, %v100, 0
    %111 = vmatpush.msra.mxu0 0.0
    %112 = vmatpush.msra.mxu0 0.0
    %113 = vmatpush.msra.mxu0 0.0
    %114 = vmatpush.msra.mxu0 0.0
    %115 = vmatpush.msra.mxu0 0.0
    %116 = vmatpush.msra.mxu0 0.0
    %117 = vmatpush.msra.mxu0 0.0
    %118 = vmatpush.msra.mxu0 0.0
    %119 = vmatpush.msra.mxu0 0.0
    %120 = vmatpush.msra.mxu0 0.0
    %121 = vmatpush.msra.mxu0 0.0
    %122 = vmatpush.msra.mxu0 0.0
    %123 = vmatpush.msra.mxu0 %v104
    %124 = vmatpush.msra.mxu0 %v103
    %125 = vmatpush.msra.mxu0 %v102
    %126 = vmatpush.msra.mxu0 %v101
    %127 = vmatmul.f32.gmra.mxu0 %v106
    %v128 = vpop.f32.mrf.mxu0
    %v129 = vadd.f32 0.0, %v128
    %130 = vmatmul.f32.gmra.mxu0 %v109
    %v131 = vpop.f32.mrf.mxu0
    %v132 = vadd.f32 0.0, %v131
    %133 = vdwg.mxu0
    %v134 = vadd.f32 %v94, %v129
    %v135 = vadd.f32 %v97, %v132
    %v136 = vld [vmem:[%s3] sm:$0x1]
    %v138 = vperm.slane %v136, 0
    %v140 = vadd.f32 %v134, %v138
    %v141 = vadd.f32 %v135, %v138
    %v142 = vtanh.pop %v140
    %v143 = vtanh.pop %v141
    %v144 = vld [vmem:[%s7] sm:$0xff]
    %v145 = vld [vmem:[%s7 + $0x8] sm:$0xff]
    %v146 = vld [vmem:[%s7 + $0x10] sm:$0xff]
    %v147 = vld [vmem:[%s7 + $0x18] sm:$0xff]
    %v148 = vld [vmem:[%s7 + $0x20] sm:$0xff]
    %v149 = vld [vmem:[%s7 + $0x28] sm:$0xff]
    %v150 = vld [vmem:[%s7 + $0x30] sm:$0xff]
    %v151 = vld [vmem:[%s7 + $0x38] sm:$0xff]
    %v152 = vld [vmem:[%s7 + $0x40] sm:$0xff]
    %v153 = vld [vmem:[%s7 + $0x48] sm:$0xff]
    %v154 = vld [vmem:[%s7 + $0x50] sm:$0xff]
    %v155 = vld [vmem:[%s7 + $0x58] sm:$0xff]
    %v156 = vld [vmem:[%s7 + $0x60] sm:$0xff]
    %v157 = vld [vmem:[%s7 + $0x68] sm:$0xff]
    %v158 = vld [vmem:[%s7 + $0x70] sm:$0xff]
    %v159 = vld [vmem:[%s7 + $0x78] sm:$0xff]
    %v160 = vld [vmem:[%s3 + $0x1] sm:$0x1]
    %v162 = vperm.slane %v160, 0
    %164 = vmatpush.msra.mxu0 %v159
    %165 = vmatpush.msra.mxu0 %v158
    %166 = vmatpush.msra.mxu0 %v157
    %167 = vmatpush.msra.mxu0 %v156
    %168 = vmatpush.msra.mxu0 %v155
    %169 = vmatpush.msra.mxu0 %v154
    %170 = vmatpush.msra.mxu0 %v153
    %171 = vmatpush.msra.mxu0 %v152
    %172 = vmatpush.msra.mxu0 %v151
    %173 = vmatpush.msra.mxu0 %v150
    %174 = vmatpush.msra.mxu0 %v149
    %175 = vmatpush.msra.mxu0 %v148
    %176 = vmatpush.msra.mxu0 %v147
    %177 = vmatpush.msra.mxu0 %v146
    %178 = vmatpush.msra.mxu0 %v145
    %179 = vmatpush.msra.mxu0 %v144
    %180 = vmatmul.f32.gmra.mxu0 %v142
    %v181 = vpop.f32.mrf.mxu0
    %v182 = vadd.f32 %v162, %v181
    %183 = vmatmul.f32.gmra.mxu0 %v143
    %v184 = vpop.f32.mrf.mxu0
    %v185 = vadd.f32 %v162, %v184
    %186 = vdwg.mxu0
    %187 = vst.msk [vmem:[#allocation2] sm:$0xff] %vm69, %v182
    %188 = vst.msk [vmem:[#allocation2 + $0x8] sm:$0xff] %vm69, %v185
    // Predicated region
    $region34: #{tpu_custom_call.1} parent=1 // pred_check
      _
    $region35: #{tpu_custom_call.1} parent=1 // pred_check_branch
      %190 = sbr.rel (0) target = $region37
    $region36: #{tpu_custom_call.1} parent=1 // pred_region
      %192 = vsyncadd [#allocation3], 0
      %s193 = sshll.u32 [#allocation2], 4
      %s194 = int_to_ptr.vmem [resolvable:$true] %s193
      %s195 = sshll.u32 %s8, 4
      %s196 = int_to_ptr.hbm [resolvable:$true] %s195
      %201 = dma.vmem_to_hbm [thread:$0]  %s194, 256, %s196, [#allocation3], 128, 128, 8
    $region37: #{tpu_custom_call.1} parent=1 // pred_fallthru
      _
    // Predicated region
    $region38: #{tpu_custom_call.1} parent=1 // pred_check
      _
    $region39: #{tpu_custom_call.1} parent=1 // pred_check_branch
      %203 = sbr.rel (0) target = $region41
    $region40: #{tpu_custom_call.1} parent=1 // pred_region
      %205 = dma.done [#allocation3], 256
    $region41: #{tpu_custom_call.1} parent=1 // pred_fallthru
      _
    %206 = vsyncpa [#allocation3], 1

</llo_original>
